<compile_context>
chip_gen: v6e
topology: v6e:2x2x1
jax: 0.10.0
libtpu: 0.0.40
codegen_flags: <defaults>
</compile_context>

<pallas_src>
import numpy as np
import jax
import jax.numpy as jnp
from jax.experimental import pallas as pl
from jax.experimental.pallas import tpu as pltpu


_B_VALUE = 100
_LANE_WIDTHS = (1024, 512, 256, 128)          # lane-dense candidates (multiples of 128)
_TARGET_BLOCK_BYTES = 4 * 1024 * 1024          # ~4 MiB per pipelined block
_SINGLE_BLOCK_MAX_BYTES = 4 * 1024 * 1024      # "whole array in one block" cutoff
_VMEM_LIMIT_BYTES = 32 * 1024 * 1024           # 4 MiB x 4 bufs = 16 MiB << 32 MiB


def _round_up(a, b):
    return ((a + b - 1) // b) * b


def _sublane_multiple(dtype):
    # (8,128) min tile is for 32-bit; packed dtypes need 16 (bf16) / 32 (int8/fp8) rows.
    itemsize = np.dtype(dtype).itemsize
    return max(8, 32 // itemsize)


def _make_add_const_kernel(b_const):
    # b_const is a numpy scalar already in the output dtype: pure load/add/store,
    # no casts, no SMEM traffic.
    def kernel(x_ref, o_ref):
        o_ref[...] = x_ref[...] + b_const
    return kernel


def _choose_tile_rows(rows, lanes, itemsize, sub):
    # ~4 MiB blocks, sublane-aligned for this dtype.
    tile_r = max(sub, (_TARGET_BLOCK_BYTES // (lanes * itemsize)) // sub * sub)
    if rows <= sub:
        # Block equals the full row extent (allowed even if not a multiple of `sub`).
        return rows
    if rows <= tile_r:
        # Keep >= 2 grid steps so ("parallel",) can shard rows across v7x's 2 TCs.
        return max(sub, _round_up(pl.cdiv(rows, 2), sub))
    return tile_r


def _tiled_add(x2d, b_const, alias_input):
    rows, lanes = x2d.shape
    dtype = x2d.dtype
    sub = _sublane_multiple(dtype)
    tile_r = _choose_tile_rows(rows, lanes, np.dtype(dtype).itemsize, sub)
    grid = (pl.cdiv(rows, tile_r),)   # partial last block is masked by Pallas

    return pl.pallas_call(
        _make_add_const_kernel(b_const),
        out_shape=jax.ShapeDtypeStruct((rows, lanes), dtype),
        grid_spec=pltpu.PrefetchScalarGridSpec(
            num_scalar_prefetch=0,
            grid=grid,
            in_specs=[pl.BlockSpec((tile_r, lanes), lambda i: (i, 0))],
            out_specs=pl.BlockSpec((tile_r, lanes), lambda i: (i, 0)),
        ),
        compiler_params=pltpu.CompilerParams(
            dimension_semantics=("parallel",),
            vmem_limit_bytes=_VMEM_LIMIT_BYTES,
        ),
        # Only alias when the operand is a fresh intermediate (padded fallback);
        # aliasing a bitcast of a non-donated jit argument would force a copy.
        input_output_aliases={0: 0} if alias_input else {},
    )(x2d)


def _forward_impl(x):
    dtype = x.dtype
    b_const = np.array(_B_VALUE, dtype=dtype)   # trace-time constant in x.dtype
    n = x.size
    if n == 0:
        return x

    itemsize = np.dtype(dtype).itemsize
    nbytes = n * itemsize

    # Lane-dense width that divides the flat size exactly (reshape = bitcast under jit).
    lanes = next((w for w in _LANE_WIDTHS if n % w == 0), None)

    if lanes is None:
        if nbytes <= _SINGLE_BLOCK_MAX_BYTES:
            # Whole array as a single VMEM block: no reshape, no padding, no grid.
            return pl.pallas_call(
                _make_add_const_kernel(b_const),
                out_shape=jax.ShapeDtypeStruct(x.shape, dtype),
                compiler_params=pltpu.CompilerParams(
                    vmem_limit_bytes=_VMEM_LIMIT_BYTES),
            )(x)
        # TODO(synk): rare fallback (large & not 128-divisible): pad to 128 lanes.
        lanes = 128
        rows = pl.cdiv(n, lanes)
        x_flat = jnp.pad(x.reshape(-1), (0, rows * lanes - n))
        out2d = _tiled_add(x_flat.reshape(rows, lanes), b_const, alias_input=True)
        return out2d.reshape(-1)[:n].reshape(x.shape)

    rows = n // lanes
    out2d = _tiled_add(x.reshape(rows, lanes), b_const, alias_input=False)
    return out2d.reshape(x.shape)


# Jit the whole wrapper so reshapes are bitcasts and everything is one dispatch.
my_module_forward = jax.jit(_forward_impl)


if __name__ == "__main__":
    key = jax.random.PRNGKey(0)
    x = jax.random.normal(key, (2, 4, 16, 16), dtype=jnp.float32)

    out = my_module_forward(x)
    jax.block_until_ready(out)

    # Sanity check against pure-JAX reference (x + 100, exact match expected).
    ref = x + jnp.asarray(_B_VALUE, dtype=x.dtype)
    assert out.shape == x.shape and out.dtype == x.dtype
    assert jnp.array_equal(out, ref)

    # Exercise the tiled lane-dense path too (rows > sublane multiple).
    x_big = jax.random.normal(jax.random.PRNGKey(1), (64, 4096), dtype=jnp.float32)
    out_big = my_module_forward(x_big)
    jax.block_until_ready(out_big)
    assert jnp.array_equal(out_big, x_big + 100.0)

    print("KERNEL_OK")
</pallas_src>

<mosaic_0001>
module attributes {stable_mosaic.version = 11 : i64} {
  func.func @kernel(%arg0: i32, %arg1: memref<2x1024xf32, #tpu.memory_space<vmem>>, %arg2: memref<2x1024xf32, #tpu.memory_space<vmem>>) attributes {dimension_semantics = [#tpu.dimension_semantics<parallel>], iteration_bounds = array<i64: 1>, scalar_prefetch = 0 : i64, scratch_operands = 0 : i64, tpu.core_type = #tpu.core_type<tc>, window_params = [{transform_indices = @transform_0, window_bounds = array<i64: 2, 1024>}, {transform_indices = @transform_1, window_bounds = array<i64: 2, 1024>}]} {
    %c0 = arith.constant 0 : index
    %c0_0 = arith.constant 0 : index
    %0 = vector.load %arg1[%c0, %c0_0] : memref<2x1024xf32, #tpu.memory_space<vmem>>, vector<2x1024xf32>
    %cst = arith.constant 1.000000e+02 : f32
    %1 = vector.broadcast %cst : f32 to vector<2x1024xf32>
    %2 = arith.addf %0, %1 : vector<2x1024xf32>
    %c0_1 = arith.constant 0 : index
    %c0_2 = arith.constant 0 : index
    %3 = vector.load %arg2[%c0_1, %c0_2] : memref<2x1024xf32, #tpu.memory_space<vmem>>, vector<2x1024xf32>
    tpu.vector_store %arg2[%c0_1, %c0_2], %2 {strides = array<i32>} : memref<2x1024xf32, #tpu.memory_space<vmem>>, vector<2x1024xf32>,
    return
  }
  func.func @transform_0(%arg0: i32) -> (i32, i32) {
    %c0_i32 = arith.constant 0 : i32
    %c0_i32_0 = arith.constant 0 : i32
    return %arg0, %c0_i32 : i32, i32
  }
  func.func @transform_1(%arg0: i32) -> (i32, i32) {
    %c0_i32 = arith.constant 0 : i32
    %c0_i32_0 = arith.constant 0 : i32
    return %arg0, %c0_i32 : i32, i32
  }
}

</mosaic_0001>

<llo_original>
// kernel: _forward_impl.1
$region0: #{_forward_impl.1}
  #allocation0 [shape = 'u32[]', space=smem, size = 0x4, offset = 0x4, fixed_abs, tag = 'smem constant byte address 0x4 - core index']
  #allocation1 [shape = 'u32[144,128]{1,0:T(1,128)}', space=vmem, size = 0x12000, scoped, tag = 'internal scratch']
  %s0 = inlined_call_operand.vmem [shape: f32[2,1024], index: 0, kind: input, shape index: {}]
  %s1 = inlined_call_operand.vmem [shape: f32[2,1024], index: 1, kind: output, shape index: {}]
  %s2 = sld [smem:[#allocation0]]
  $region14: #{_forward_impl.1} parent=0
    _
  %s4 = ssub.s32 1, %s2
  %s5 = scalar_select 0, %s4, %s2
  // Predicated region
  $region2: #{_forward_impl.1} parent=0 // pred_check
    _
  $region3: #{_forward_impl.1} parent=0 // pred_check_branch
    %7 = sbr.rel (0) target = $region5
  $region4: #{_forward_impl.1} parent=0 // pred_region
    _
  $region5: #{_forward_impl.1} parent=0 // pred_fallthru
    _
  %v8 = vld [vmem:[%s0] sm:$0xff]
  %v9 = vld [vmem:[%s0 + $0x8] sm:$0xff]
  %v10 = vadd.f32 %v8, 100.0
  %v11 = vadd.f32 %v9, 100.0
  %12 = vst [vmem:[%s1] sm:$0xff] %v10
  %13 = vst [vmem:[%s1 + $0x8] sm:$0xff] %v11
  // Predicated region
  $region6: #{_forward_impl.1} parent=0 // pred_check
    _
  $region7: #{_forward_impl.1} parent=0 // pred_check_branch
    %15 = sbr.rel (0) target = $region9
  $region8: #{_forward_impl.1} parent=0 // pred_region
    _
  $region9: #{_forward_impl.1} parent=0 // pred_fallthru
    _
  // Predicated region
  $region10: #{_forward_impl.1} parent=0 // pred_check
    _
  $region11: #{_forward_impl.1} parent=0 // pred_check_branch
    %17 = sbr.rel (0) target = $region13
  $region12: #{_forward_impl.1} parent=0 // pred_region
    _
  $region13: #{_forward_impl.1} parent=0 // pred_fallthru
    _

</llo_original>
